<compile_context>
chip_gen: v7x
topology: tpu7x:2x2x1
jax: 0.10.0
libtpu: 0.0.40
codegen_flags: <defaults>
</compile_context>

<pallas_src>
import jax
import jax.numpy as jnp
from jax import lax
from jax.experimental import pallas as pl
from jax.experimental.pallas import tpu as pltpu


def _choose_tile(hw: int, max_tile: int) -> int:
    """Largest multiple-of-128 divisor of hw that is <= max_tile (fallback: hw)."""
    if hw % 128 != 0:
        return hw  # whole-image block (block dim == full array dim is allowed)
    best = 128
    t = 128
    while t <= max_tile:
        if hw % t == 0:
            best = t
        t += 128
    return best


def _make_kernel(ignore_index, hw, num_classes, tile, n_tiles):
    def kernel(logits_ref, labels_ref, out_ref,
               m_ref, se_ref, sle_ref, sl_ref, lmin_ref, lmax_ref):
        s = pl.program_id(1)

        @pl.when(s == 0)
        def _():
            m_ref[...] = jnp.full_like(m_ref, -1e30)
            se_ref[...] = jnp.zeros_like(se_ref)
            sle_ref[...] = jnp.zeros_like(sle_ref)
            sl_ref[...] = jnp.zeros_like(sl_ref)
            lmin_ref[...] = jnp.full_like(lmin_ref, 2.0 ** 30)
            lmax_ref[...] = jnp.full_like(lmax_ref, -1.0)

        logits = logits_ref[...].astype(jnp.float32)   # (C, TILE)  class on sublane
        labels = labels_ref[...]                       # (1, TILE)  int32, lane-dense

        # ---- per-pixel cross entropy (reduction='none', ignore_index -> 0) ----
        mx = jnp.max(logits, axis=0, keepdims=True)                      # (1, TILE)
        z = jnp.exp(logits - mx)                                         # (C, TILE)
        lse = mx + jnp.log(jnp.sum(z, axis=0, keepdims=True))            # (1, TILE)
        cls = lax.broadcasted_iota(jnp.int32, (num_classes, tile), 0)    # (C, TILE)
        picked = jnp.sum(jnp.where(cls == labels, logits, 0.0),
                         axis=0, keepdims=True)                          # (1, TILE)
        valid = labels != ignore_index
        loss = jnp.where(valid, lse - picked, 0.0)                       # (1, TILE)

        # ---- online softmax(-loss) over the spatial axis of this image --------
        metric = -loss
        m_old = m_ref[...]                                               # (1, 1)
        m_new = jnp.maximum(m_old, jnp.max(metric, axis=1, keepdims=True))
        scale = jnp.exp(m_old - m_new)
        e = jnp.exp(metric - m_new)                                      # (1, TILE)
        se_ref[...] = se_ref[...] * scale + jnp.sum(e, axis=1, keepdims=True)
        sle_ref[...] = sle_ref[...] * scale + jnp.sum(loss * e, axis=1,
                                                      keepdims=True)
        sl_ref[...] = sl_ref[...] + jnp.sum(loss, axis=1, keepdims=True)
        m_ref[...] = m_new

        # ---- track min/max of non-255 labels (PyTorch hard-codes 255 here,
        #      independent of ignore_index; we match that exactly) -------------
        labf = labels.astype(jnp.float32)
        not255 = labels != 255
        lmin_ref[...] = jnp.minimum(
            lmin_ref[...],
            jnp.min(jnp.where(not255, labf, 2.0 ** 30), axis=1, keepdims=True))
        lmax_ref[...] = jnp.maximum(
            lmax_ref[...],
            jnp.max(jnp.where(not255, labf, -1.0), axis=1, keepdims=True))

        # ---- finalize this image on its last spatial tile ----------------------
        @pl.when(s == n_tiles - 1)
        def _():
            # <=1 distinct non-255 label (incl. "all ignored") -> weight = 1
            all_same = lmin_ref[...] >= lmax_ref[...]                    # (1, 1)
            weighted = (float(hw) * sle_ref[...]) / se_ref[...]          # (1, 1)
            contrib = jnp.where(all_same, sl_ref[...], weighted)         # (1, 1)
            out_ref[0] = jnp.broadcast_to(contrib, (1, 128))

    return kernel


def uncertainty_ce_loss(pred_u, pseudo_label, ignore_index=255,
                        max_tile_pixels=8192):
    """pred_u: (N, C, H, W) float logits; pseudo_label: (N, H, W) int labels."""
    n, c, h, w = pred_u.shape
    hw = h * w
    tile = _choose_tile(hw, max_tile_pixels)
    n_tiles = hw // tile

    # NCHW-native, free contiguous reshapes (no HBM transpose pass).
    logits = pred_u.reshape(n, c, hw)
    labels = pseudo_label.astype(jnp.int32).reshape(n, 1, hw)

    kernel = _make_kernel(ignore_index, hw, c, tile, n_tiles)
    per_image = pl.pallas_call(
        kernel,
        out_shape=jax.ShapeDtypeStruct((n, 1, 128), jnp.float32),
        grid_spec=pltpu.PrefetchScalarGridSpec(
            num_scalar_prefetch=0,
            grid=(n, n_tiles),
            in_specs=[
                pl.BlockSpec((pl.Squeezed(), c, tile), lambda b, s: (b, 0, s)),
                pl.BlockSpec((pl.Squeezed(), 1, tile), lambda b, s: (b, 0, s)),
            ],
            out_specs=pl.BlockSpec((1, 1, 128), lambda b, s: (b, 0, 0)),
            scratch_shapes=[
                pltpu.VMEM((1, 1), jnp.float32),   # running max of -loss
                pltpu.VMEM((1, 1), jnp.float32),   # running sum exp
                pltpu.VMEM((1, 1), jnp.float32),   # running sum loss*exp
                pltpu.VMEM((1, 1), jnp.float32),   # running sum loss
                pltpu.VMEM((1, 1), jnp.float32),   # running min of non-255 labels
                pltpu.VMEM((1, 1), jnp.float32),   # running max of non-255 labels
            ],
        ),
        compiler_params=pltpu.CompilerParams(
            dimension_semantics=("parallel", "arbitrary")),
        cost_estimate=pl.CostEstimate(
            flops=n * hw * (6 * c + 24),
            transcendentals=n * hw * (c + 2),
            bytes_accessed=(logits.size * logits.dtype.itemsize
                            + labels.size * 4 + n * 128 * 4),
        ),
    )(logits, labels)

    # Final scalar mean (== .mean() over all N*H*W element-wise weighted losses).
    return jnp.sum(per_image[:, 0, 0]) / float(n * hw)


def _reference(pred_u, pseudo_label, ignore_index=255):
    """Pure-JAX reference mirroring the PyTorch forward (for verification)."""
    n, c, h, w = pred_u.shape
    logits = jnp.transpose(pred_u, (0, 2, 3, 1))
    logp = jax.nn.log_softmax(logits, axis=-1)
    lab = pseudo_label
    valid = lab != ignore_index
    lab_safe = jnp.where(valid, lab, 0)
    nll = -jnp.take_along_axis(logp, lab_safe[..., None], axis=-1)[..., 0]
    loss = jnp.where(valid, nll, 0.0)
    metric = -loss.reshape(n, h * w)
    weight = jax.nn.softmax(metric, axis=1) * (h * w)
    weight = weight.reshape(n, h, w)
    for i in range(n):
        tags = set(map(int, jnp.reshape(pseudo_label[i], (-1,)).tolist())) - {255}
        if len(tags) <= 1:
            weight = weight.at[i].set(1.0)
    return jnp.mean(loss * weight)


if __name__ == "__main__":
    key = jax.random.PRNGKey(0)
    N, C, H, W = 2, 4, 16, 16
    k1, k2, k3 = jax.random.split(key, 3)

    pred_u = jax.random.normal(k1, (N, C, H, W), dtype=jnp.float32)

    # batch 0: many classes + some ignored; batch 1: single class + some ignored
    # (exercises the "<=1 distinct labels -> weight = 1" branch).
    lbl0 = jax.random.randint(k2, (H, W), 0, C, dtype=jnp.int32)
    lbl1 = jnp.full((H, W), 2, dtype=jnp.int32)
    ignore_mask = jax.random.bernoulli(k3, 0.1, (2, H, W))
    pseudo_label = jnp.stack([lbl0, lbl1], axis=0)
    pseudo_label = jnp.where(ignore_mask, jnp.int32(255), pseudo_label)

    ref = _reference(pred_u, pseudo_label, ignore_index=255)

    # Default tiling (HW = 256 -> single spatial tile per image).
    out1 = jax.block_until_ready(uncertainty_ce_loss(pred_u, pseudo_label, 255))
    assert jnp.allclose(out1, ref, rtol=1e-4, atol=1e-5), (out1, ref)

    # Force two spatial tiles per image to exercise the online-softmax rescaling.
    out2 = jax.block_until_ready(
        uncertainty_ce_loss(pred_u, pseudo_label, 255, max_tile_pixels=128))
    assert jnp.allclose(out2, ref, rtol=1e-4, atol=1e-5), (out2, ref)

    print("KERNEL_OK")
</pallas_src>

<mosaic_0001>
module attributes {stable_mosaic.version = 11 : i64} {
  func.func @kernel(%arg0: i32, %arg1: i32, %arg2: memref<1x4x256xf32, #tpu.memory_space<vmem>>, %arg3: memref<1x1x256xi32, #tpu.memory_space<vmem>>, %arg4: memref<1x1x128xf32, #tpu.memory_space<vmem>>, %arg5: memref<1x1xf32, #tpu.memory_space<vmem>>, %arg6: memref<1x1xf32, #tpu.memory_space<vmem>>, %arg7: memref<1x1xf32, #tpu.memory_space<vmem>>, %arg8: memref<1x1xf32, #tpu.memory_space<vmem>>, %arg9: memref<1x1xf32, #tpu.memory_space<vmem>>, %arg10: memref<1x1xf32, #tpu.memory_space<vmem>>) attributes {dimension_semantics = [#tpu.dimension_semantics<parallel>, #tpu.dimension_semantics<arbitrary>], iteration_bounds = array<i64: 2, 1>, scalar_prefetch = 0 : i64, scratch_operands = 6 : i64, tpu.core_type = #tpu.core_type<tc>, window_params = [{transform_indices = @transform_0, window_bounds = array<i64: 1, 4, 256>}, {transform_indices = @transform_1, window_bounds = array<i64: 1, 1, 256>}, {transform_indices = @transform_2, window_bounds = array<i64: 1, 1, 128>}]} {
    %c0_i32 = arith.constant 0 : i32
    %0 = arith.cmpi eq, %arg1, %c0_i32 : i32
    %1 = arith.extui %0 : i1 to i32
    %c0_i32_0 = arith.constant 0 : i32
    %2 = arith.cmpi ne, %1, %c0_i32_0 : i32
    scf.if %2 {
      %cst_46 = arith.constant -1.000000e+30 : f32
      %78 = vector.broadcast %cst_46 : f32 to vector<1x1xf32>
      %c0_47 = arith.constant 0 : index
      %c0_48 = arith.constant 0 : index
      %79 = vector.load %arg5[%c0_47, %c0_48] : memref<1x1xf32, #tpu.memory_space<vmem>>, vector<1x1xf32>
      tpu.vector_store %arg5[%c0_47, %c0_48], %78 {strides = array<i32>} : memref<1x1xf32, #tpu.memory_space<vmem>>, vector<1x1xf32>,
      %cst_49 = arith.constant 0.000000e+00 : f32
      %80 = vector.broadcast %cst_49 : f32 to vector<1x1xf32>
      %c0_50 = arith.constant 0 : index
      %c0_51 = arith.constant 0 : index
      %81 = vector.load %arg6[%c0_50, %c0_51] : memref<1x1xf32, #tpu.memory_space<vmem>>, vector<1x1xf32>
      tpu.vector_store %arg6[%c0_50, %c0_51], %80 {strides = array<i32>} : memref<1x1xf32, #tpu.memory_space<vmem>>, vector<1x1xf32>,
      %cst_52 = arith.constant 0.000000e+00 : f32
      %82 = vector.broadcast %cst_52 : f32 to vector<1x1xf32>
      %c0_53 = arith.constant 0 : index
      %c0_54 = arith.constant 0 : index
      %83 = vector.load %arg7[%c0_53, %c0_54] : memref<1x1xf32, #tpu.memory_space<vmem>>, vector<1x1xf32>
      tpu.vector_store %arg7[%c0_53, %c0_54], %82 {strides = array<i32>} : memref<1x1xf32, #tpu.memory_space<vmem>>, vector<1x1xf32>,
      %cst_55 = arith.constant 0.000000e+00 : f32
      %84 = vector.broadcast %cst_55 : f32 to vector<1x1xf32>
      %c0_56 = arith.constant 0 : index
      %c0_57 = arith.constant 0 : index
      %85 = vector.load %arg8[%c0_56, %c0_57] : memref<1x1xf32, #tpu.memory_space<vmem>>, vector<1x1xf32>
      tpu.vector_store %arg8[%c0_56, %c0_57], %84 {strides = array<i32>} : memref<1x1xf32, #tpu.memory_space<vmem>>, vector<1x1xf32>,
      %cst_58 = arith.constant 1.07374182E+9 : f32
      %86 = vector.broadcast %cst_58 : f32 to vector<1x1xf32>
      %c0_59 = arith.constant 0 : index
      %c0_60 = arith.constant 0 : index
      %87 = vector.load %arg9[%c0_59, %c0_60] : memref<1x1xf32, #tpu.memory_space<vmem>>, vector<1x1xf32>
      tpu.vector_store %arg9[%c0_59, %c0_60], %86 {strides = array<i32>} : memref<1x1xf32, #tpu.memory_space<vmem>>, vector<1x1xf32>,
      %cst_61 = arith.constant -1.000000e+00 : f32
      %88 = vector.broadcast %cst_61 : f32 to vector<1x1xf32>
      %c0_62 = arith.constant 0 : index
      %c0_63 = arith.constant 0 : index
      %89 = vector.load %arg10[%c0_62, %c0_63] : memref<1x1xf32, #tpu.memory_space<vmem>>, vector<1x1xf32>
      tpu.vector_store %arg10[%c0_62, %c0_63], %88 {strides = array<i32>} : memref<1x1xf32, #tpu.memory_space<vmem>>, vector<1x1xf32>,
    } else {
    }
    %c0 = arith.constant 0 : index
    %c0_1 = arith.constant 0 : index
    %c0_2 = arith.constant 0 : index
    %3 = vector.load %arg2[%c0, %c0_1, %c0_2] : memref<1x4x256xf32, #tpu.memory_space<vmem>>, vector<1x4x256xf32>
    %4 = vector.shape_cast %3 : vector<1x4x256xf32> to vector<4x256xf32>
    %c0_3 = arith.constant 0 : index
    %c0_4 = arith.constant 0 : index
    %c0_5 = arith.constant 0 : index
    %5 = vector.load %arg3[%c0_3, %c0_4, %c0_5] : memref<1x1x256xi32, #tpu.memory_space<vmem>>, vector<1x1x256xi32>
    %6 = vector.shape_cast %5 : vector<1x1x256xi32> to vector<1x256xi32>
    %cst = arith.constant dense<0xFF800000> : vector<256xf32>
    %7 = vector.multi_reduction <maximumf>, %4, %cst [0] : vector<4x256xf32> to vector<256xf32>
    %8 = vector.shape_cast %7 : vector<256xf32> to vector<1x256xf32>
    %9 = vector.broadcast %8 : vector<1x256xf32> to vector<4x256xf32>
    %10 = arith.subf %4, %9 : vector<4x256xf32>
    %11 = math.exp %10 : vector<4x256xf32>
    %cst_6 = arith.constant dense<0.000000e+00> : vector<256xf32>
    %12 = vector.multi_reduction <add>, %11, %cst_6 [0] : vector<4x256xf32> to vector<256xf32>
    %13 = vector.shape_cast %12 : vector<256xf32> to vector<1x256xf32>
    %14 = math.log %13 : vector<1x256xf32>
    %15 = arith.addf %8, %14 : vector<1x256xf32>
    %16 = tpu.iota {dimensions = array<i32: 0>} : vector<4x256xi32>
    %17 = vector.broadcast %6 : vector<1x256xi32> to vector<4x256xi32>
    %18 = arith.cmpi eq, %16, %17 : vector<4x256xi32>
    %cst_7 = arith.constant 0.000000e+00 : f32
    %19 = vector.broadcast %cst_7 : f32 to vector<4x256xf32>
    %20 = arith.select %18, %4, %19 : vector<4x256xi1>, vector<4x256xf32>
    %cst_8 = arith.constant dense<0.000000e+00> : vector<256xf32>
    %21 = vector.multi_reduction <add>, %20, %cst_8 [0] : vector<4x256xf32> to vector<256xf32>
    %22 = vector.shape_cast %21 : vector<256xf32> to vector<1x256xf32>
    %c255_i32 = arith.constant 255 : i32
    %23 = vector.broadcast %c255_i32 : i32 to vector<1x256xi32>
    %24 = arith.cmpi ne, %6, %23 : vector<1x256xi32>
    %25 = arith.subf %15, %22 : vector<1x256xf32>
    %cst_9 = arith.constant 0.000000e+00 : f32
    %26 = vector.broadcast %cst_9 : f32 to vector<1x256xf32>
    %27 = arith.select %24, %25, %26 : vector<1x256xi1>, vector<1x256xf32>
    %cst_10 = arith.constant 0.000000e+00 : f32
    %28 = vector.broadcast %cst_10 : f32 to vector<1x256xf32>
    %29 = arith.subf %28, %27 : vector<1x256xf32>
    %c0_11 = arith.constant 0 : index
    %c0_12 = arith.constant 0 : index
    %30 = vector.load %arg5[%c0_11, %c0_12] : memref<1x1xf32, #tpu.memory_space<vmem>>, vector<1x1xf32>
    %cst_13 = arith.constant dense<0xFF800000> : vector<1xf32>
    %31 = vector.multi_reduction <maximumf>, %29, %cst_13 [1] : vector<1x256xf32> to vector<1xf32>
    %32 = vector.shape_cast %31 : vector<1xf32> to vector<1x1xf32>
    %33 = arith.maximumf %30, %32 : vector<1x1xf32>
    %34 = arith.subf %30, %33 : vector<1x1xf32>
    %35 = math.exp %34 : vector<1x1xf32>
    %36 = vector.broadcast %33 : vector<1x1xf32> to vector<1x256xf32>
    %37 = arith.subf %29, %36 : vector<1x256xf32>
    %38 = math.exp %37 : vector<1x256xf32>
    %c0_14 = arith.constant 0 : index
    %c0_15 = arith.constant 0 : index
    %39 = vector.load %arg6[%c0_14, %c0_15] : memref<1x1xf32, #tpu.memory_space<vmem>>, vector<1x1xf32>
    %40 = arith.mulf %39, %35 : vector<1x1xf32>
    %cst_16 = arith.constant dense<0.000000e+00> : vector<1xf32>
    %41 = vector.multi_reduction <add>, %38, %cst_16 [1] : vector<1x256xf32> to vector<1xf32>
    %42 = vector.shape_cast %41 : vector<1xf32> to vector<1x1xf32>
    %43 = arith.addf %40, %42 : vector<1x1xf32>
    %c0_17 = arith.constant 0 : index
    %c0_18 = arith.constant 0 : index
    %44 = vector.load %arg6[%c0_17, %c0_18] : memref<1x1xf32, #tpu.memory_space<vmem>>, vector<1x1xf32>
    tpu.vector_store %arg6[%c0_17, %c0_18], %43 {strides = array<i32>} : memref<1x1xf32, #tpu.memory_space<vmem>>, vector<1x1xf32>,
    %c0_19 = arith.constant 0 : index
    %c0_20 = arith.constant 0 : index
    %45 = vector.load %arg7[%c0_19, %c0_20] : memref<1x1xf32, #tpu.memory_space<vmem>>, vector<1x1xf32>
    %46 = arith.mulf %45, %35 : vector<1x1xf32>
    %47 = arith.mulf %27, %38 : vector<1x256xf32>
    %cst_21 = arith.constant dense<0.000000e+00> : vector<1xf32>
    %48 = vector.multi_reduction <add>, %47, %cst_21 [1] : vector<1x256xf32> to vector<1xf32>
    %49 = vector.shape_cast %48 : vector<1xf32> to vector<1x1xf32>
    %50 = arith.addf %46, %49 : vector<1x1xf32>
    %c0_22 = arith.constant 0 : index
    %c0_23 = arith.constant 0 : index
    %51 = vector.load %arg7[%c0_22, %c0_23] : memref<1x1xf32, #tpu.memory_space<vmem>>, vector<1x1xf32>
    tpu.vector_store %arg7[%c0_22, %c0_23], %50 {strides = array<i32>} : memref<1x1xf32, #tpu.memory_space<vmem>>, vector<1x1xf32>,
    %c0_24 = arith.constant 0 : index
    %c0_25 = arith.constant 0 : index
    %52 = vector.load %arg8[%c0_24, %c0_25] : memref<1x1xf32, #tpu.memory_space<vmem>>, vector<1x1xf32>
    %cst_26 = arith.constant dense<0.000000e+00> : vector<1xf32>
    %53 = vector.multi_reduction <add>, %27, %cst_26 [1] : vector<1x256xf32> to vector<1xf32>
    %54 = vector.shape_cast %53 : vector<1xf32> to vector<1x1xf32>
    %55 = arith.addf %52, %54 : vector<1x1xf32>
    %c0_27 = arith.constant 0 : index
    %c0_28 = arith.constant 0 : index
    %56 = vector.load %arg8[%c0_27, %c0_28] : memref<1x1xf32, #tpu.memory_space<vmem>>, vector<1x1xf32>
    tpu.vector_store %arg8[%c0_27, %c0_28], %55 {strides = array<i32>} : memref<1x1xf32, #tpu.memory_space<vmem>>, vector<1x1xf32>,
    %c0_29 = arith.constant 0 : index
    %c0_30 = arith.constant 0 : index
    %57 = vector.load %arg5[%c0_29, %c0_30] : memref<1x1xf32, #tpu.memory_space<vmem>>, vector<1x1xf32>
    tpu.vector_store %arg5[%c0_29, %c0_30], %33 {strides = array<i32>} : memref<1x1xf32, #tpu.memory_space<vmem>>, vector<1x1xf32>,
    %58 = arith.sitofp %6 : vector<1x256xi32> to vector<1x256xf32>
    %c255_i32_31 = arith.constant 255 : i32
    %59 = vector.broadcast %c255_i32_31 : i32 to vector<1x256xi32>
    %60 = arith.cmpi ne, %6, %59 : vector<1x256xi32>
    %c0_32 = arith.constant 0 : index
    %c0_33 = arith.constant 0 : index
    %61 = vector.load %arg9[%c0_32, %c0_33] : memref<1x1xf32, #tpu.memory_space<vmem>>, vector<1x1xf32>
    %cst_34 = arith.constant 1.07374182E+9 : f32
    %62 = vector.broadcast %cst_34 : f32 to vector<1x256xf32>
    %63 = arith.select %60, %58, %62 : vector<1x256xi1>, vector<1x256xf32>
    %cst_35 = arith.constant dense<0x7F800000> : vector<1xf32>
    %64 = vector.multi_reduction <minimumf>, %63, %cst_35 [1] : vector<1x256xf32> to vector<1xf32>
    %65 = vector.shape_cast %64 : vector<1xf32> to vector<1x1xf32>
    %66 = arith.minimumf %61, %65 : vector<1x1xf32>
    %c0_36 = arith.constant 0 : index
    %c0_37 = arith.constant 0 : index
    %67 = vector.load %arg9[%c0_36, %c0_37] : memref<1x1xf32, #tpu.memory_space<vmem>>, vector<1x1xf32>
    tpu.vector_store %arg9[%c0_36, %c0_37], %66 {strides = array<i32>} : memref<1x1xf32, #tpu.memory_space<vmem>>, vector<1x1xf32>,
    %c0_38 = arith.constant 0 : index
    %c0_39 = arith.constant 0 : index
    %68 = vector.load %arg10[%c0_38, %c0_39] : memref<1x1xf32, #tpu.memory_space<vmem>>, vector<1x1xf32>
    %cst_40 = arith.constant -1.000000e+00 : f32
    %69 = vector.broadcast %cst_40 : f32 to vector<1x256xf32>
    %70 = arith.select %60, %58, %69 : vector<1x256xi1>, vector<1x256xf32>
    %cst_41 = arith.constant dense<0xFF800000> : vector<1xf32>
    %71 = vector.multi_reduction <maximumf>, %70, %cst_41 [1] : vector<1x256xf32> to vector<1xf32>
    %72 = vector.shape_cast %71 : vector<1xf32> to vector<1x1xf32>
    %73 = arith.maximumf %68, %72 : vector<1x1xf32>
    %c0_42 = arith.constant 0 : index
    %c0_43 = arith.constant 0 : index
    %74 = vector.load %arg10[%c0_42, %c0_43] : memref<1x1xf32, #tpu.memory_space<vmem>>, vector<1x1xf32>
    tpu.vector_store %arg10[%c0_42, %c0_43], %73 {strides = array<i32>} : memref<1x1xf32, #tpu.memory_space<vmem>>, vector<1x1xf32>,
    %c0_i32_44 = arith.constant 0 : i32
    %75 = arith.cmpi eq, %arg1, %c0_i32_44 : i32
    %76 = arith.extui %75 : i1 to i32
    %c0_i32_45 = arith.constant 0 : i32
    %77 = arith.cmpi ne, %76, %c0_i32_45 : i32
    scf.if %77 {
      %c0_46 = arith.constant 0 : index
      %c0_47 = arith.constant 0 : index
      %78 = vector.load %arg9[%c0_46, %c0_47] : memref<1x1xf32, #tpu.memory_space<vmem>>, vector<1x1xf32>
      %c0_48 = arith.constant 0 : index
      %c0_49 = arith.constant 0 : index
      %79 = vector.load %arg10[%c0_48, %c0_49] : memref<1x1xf32, #tpu.memory_space<vmem>>, vector<1x1xf32>
      %80 = arith.cmpf oge, %78, %79 : vector<1x1xf32>
      %c0_50 = arith.constant 0 : index
      %c0_51 = arith.constant 0 : index
      %81 = vector.load %arg7[%c0_50, %c0_51] : memref<1x1xf32, #tpu.memory_space<vmem>>, vector<1x1xf32>
      %cst_52 = arith.constant 2.560000e+02 : f32
      %82 = vector.broadcast %cst_52 : f32 to vector<1x1xf32>
      %83 = arith.mulf %82, %81 : vector<1x1xf32>
      %c0_53 = arith.constant 0 : index
      %c0_54 = arith.constant 0 : index
      %84 = vector.load %arg6[%c0_53, %c0_54] : memref<1x1xf32, #tpu.memory_space<vmem>>, vector<1x1xf32>
      %85 = arith.divf %83, %84 : vector<1x1xf32>
      %c0_55 = arith.constant 0 : index
      %c0_56 = arith.constant 0 : index
      %86 = vector.load %arg8[%c0_55, %c0_56] : memref<1x1xf32, #tpu.memory_space<vmem>>, vector<1x1xf32>
      %87 = arith.select %80, %86, %85 : vector<1x1xi1>, vector<1x1xf32>
      %88 = vector.shape_cast %87 : vector<1x1xf32> to vector<1x1xf32>
      %89 = vector.broadcast %88 : vector<1x1xf32> to vector<1x128xf32>
      %c0_57 = arith.constant 0 : index
      %c0_58 = arith.constant 0 : index
      %c0_59 = arith.constant 0 : index
      %90 = vector.load %arg4[%c0_57, %c0_58, %c0_59] : memref<1x1x128xf32, #tpu.memory_space<vmem>>, vector<1x1x128xf32>
      %91 = vector.shape_cast %90 : vector<1x1x128xf32> to vector<1x128xf32>
      %92 = vector.shape_cast %89 : vector<1x128xf32> to vector<1x1x128xf32>
      tpu.vector_store %arg4[%c0_57, %c0_58, %c0_59], %92 {strides = array<i32>} : memref<1x1x128xf32, #tpu.memory_space<vmem>>, vector<1x1x128xf32>,
    } else {
    }
    return
  }
  func.func @transform_0(%arg0: i32, %arg1: i32) -> (i32, i32, i32) {
    %c0_i32 = arith.constant 0 : i32
    %c0_i32_0 = arith.constant 0 : i32
    return %arg0, %c0_i32, %arg1 : i32, i32, i32
  }
  func.func @transform_1(%arg0: i32, %arg1: i32) -> (i32, i32, i32) {
    %c0_i32 = arith.constant 0 : i32
    %c0_i32_0 = arith.constant 0 : i32
    return %arg0, %c0_i32, %arg1 : i32, i32, i32
  }
  func.func @transform_2(%arg0: i32, %arg1: i32) -> (i32, i32, i32) {
    %c0_i32 = arith.constant 0 : i32
    %c0_i32_0 = arith.constant 0 : i32
    %c0_i32_1 = arith.constant 0 : i32
    return %arg0, %c0_i32, %c0_i32_0 : i32, i32, i32
  }
}

</mosaic_0001>

<llo_original>
// kernel: tpu_custom_call.1
$region0: #{tpu_custom_call.1}
  #allocation0 [shape = 'u32[]', space=smem, size = 0x4, offset = 0x4, fixed_abs, tag = 'smem constant byte address 0x4 - core index']
  #allocation1 [shape = 'u32[144,128]{1,0:T(1,128)}', space=vmem, size = 0x12000, scoped, tag = 'internal scratch']
  #allocation2 [shape = 'f32[1,1]{1,0:T(1,128)}', space=vmem, size = 0x200, scoped, tag = 'scratch operand']
  #allocation3 [shape = 'f32[1,1]{1,0:T(1,128)}', space=vmem, size = 0x200, scoped, tag = 'scratch operand']
  #allocation4 [shape = 'f32[1,1]{1,0:T(1,128)}', space=vmem, size = 0x200, scoped, tag = 'scratch operand']
  #allocation5 [shape = 'f32[1,1]{1,0:T(1,128)}', space=vmem, size = 0x200, scoped, tag = 'scratch operand']
  #allocation6 [shape = 'f32[1,1]{1,0:T(1,128)}', space=vmem, size = 0x200, scoped, tag = 'scratch operand']
  #allocation7 [shape = 'f32[1,1]{1,0:T(1,128)}', space=vmem, size = 0x200, scoped, tag = 'scratch operand']
  %s0 = inlined_call_operand.hbm [shape: f32[2,4,256], index: 0, kind: input, shape index: {}]
  %s1 = inlined_call_operand.hbm [shape: s32[2,1,256], index: 1, kind: input, shape index: {}]
  %s2 = inlined_call_operand.hbm [shape: f32[2,1,128], index: 2, kind: output, shape index: {}]
  %s3 = sld [smem:[#allocation0]]
  $region57: #{tpu_custom_call.1} parent=0
    _
  %s5 = ssub.s32 1, %s3
  %s6 = scalar_select 0, %s5, %s3
  $region1: #{tpu_custom_call.1} parent=0
    #allocation8 [shape = 'u8[8192]{0}', space=vmem, size = 0x2000, scoped, tag = 'input window, operand 0']
    #allocation9 [shape = 's32[2]{0}', space=sflag, size = 0x8, scoped, tag = 'scoped memory for tpu_custom_call.1']
    #allocation10 [shape = 's32[2]{0}', space=sflag, size = 0x8, scoped, tag = 'scoped memory for tpu_custom_call.1']
    #allocation11 [shape = 'u8[2048]{0}', space=vmem, size = 0x800, scoped, tag = 'input window, operand 1']
    #allocation12 [shape = 's32[2]{0}', space=sflag, size = 0x8, scoped, tag = 'scoped memory for tpu_custom_call.1']
    #allocation13 [shape = 'u8[1024]{0}', space=vmem, size = 0x400, scoped, tag = 'output window, operand 0']
    %7 = vsyncpa [#allocation9], 0
    %s8 = scalar_lea.sflag [#allocation9], 1
    %9 = vsyncpa %s8, 0
    %10 = vsyncpa [#allocation12], 0
    %s11 = scalar_lea.sflag [#allocation12], 1
    %12 = vsyncpa %s11, 0
    %13 = vsyncpa [#allocation10], 0
    %s14 = scalar_lea.sflag [#allocation10], 1
    %15 = vsyncpa %s14, 0
    loop: start=0, step=1, limit=4
    $region2: #{tpu_custom_call.1} parent=1 // loop_pre_header
      _
    $region3: #{tpu_custom_call.1} parent=1 // loop_header
      %s17 = sphi 0, %s21
      %p18 = scmp.ge.s32.totalorder %s17, 4
      %s24 = sphi 0, %s36
      %s25 = sphi 0, %s32
      %s26 = sphi 0, %s24
      %s27 = sphi 0, %s25
      %s28 = sphi 0, %s26
      %s29 = sphi 0, %s27
      %s41 = sphi 0, %s43
      %s44 = sphi 0, %s41
      %s45 = sphi 0, %s44
      %s61 = sphi 0, %s45
      %s69 = sphi 0, %s71
      %s72 = sphi 0, %s69
      %s73 = sphi 0, %s72
      %s89 = sphi 0, %s73
      %s95 = sphi 0, %s97
      %s98 = sphi 0, %s95
      %s99 = sphi 0, %s98
      %s115 = sphi 0, %s99
    $region4: #{tpu_custom_call.1} parent=1 // loop_header_branch
      %20 = sbr.rel (%p18) target = $region8
    $region5: #{tpu_custom_call.1} parent=1 // loop_body
      %s22 = ssub.s32 %s17, 1
      %s23 = ssub.s32 %s17, 2
      %s30 = sadd.s32 1, %s25
      %p31 = scmp.ge.s32.totalorder %s30, 1
      %s32 = scalar_select %p31, 0, %s30
      %s33 = sadd.s32 1, %s24
      %s34 = scalar_select %p31, %s33, %s24
      %p35 = scmp.ge.s32.totalorder %s34, 2
      %s36 = scalar_select %p35, 0, %s34
      %s37 = ssub.s32 %s24, %s36
      %s38 = ssub.s32 %s25, %s32
      %s39 = sor.u32 %s37, %s38
      %p40 = scmp.eq.s32.totalorder %s39, 0
      %s42 = sadd.s32 %s41, 1
      %s43 = scalar_select %p40, %s41, %s42
      %p46 = pneg %p40
      %p47 = scmp.eq.s32.totalorder %s17, 1
      %p48 = por %p46, %p47
      %p49 = scmp.ne.s32.totalorder %s41, %s44
      %p50 = scmp.eq.s32.totalorder %s17, 0
      %p51 = por %p49, %p50
      %p52 = scmp.ne.s32.totalorder %s41, %s44
      %p53 = scmp.eq.s32.totalorder %s22, 1
      %p54 = por %p52, %p53
      %p55 = scmp.ne.s32.totalorder %s44, %s45
      %p56 = scmp.eq.s32.totalorder %s22, 0
      %p57 = por %p55, %p56
      %p58 = scmp.ne.s32.totalorder %s44, %s45
      %p59 = scmp.eq.s32.totalorder %s23, 1
      %p60 = por %p58, %p59
      %p62 = scmp.ne.s32.totalorder %s45, %s61
      %p63 = scmp.eq.s32.totalorder %s23, 0
      %p64 = por %p62, %p63
      %s65 = ssub.s32 %s24, %s36
      %s66 = ssub.s32 %s25, %s32
      %s67 = sor.u32 %s65, %s66
      %p68 = scmp.eq.s32.totalorder %s67, 0
      %s70 = sadd.s32 %s69, 1
      %s71 = scalar_select %p68, %s69, %s70
      %p74 = pneg %p68
      %p75 = scmp.eq.s32.totalorder %s17, 1
      %p76 = por %p74, %p75
      %p77 = scmp.ne.s32.totalorder %s69, %s72
      %p78 = scmp.eq.s32.totalorder %s17, 0
      %p79 = por %p77, %p78
      %p80 = scmp.ne.s32.totalorder %s69, %s72
      %p81 = scmp.eq.s32.totalorder %s22, 1
      %p82 = por %p80, %p81
      %p83 = scmp.ne.s32.totalorder %s72, %s73
      %p84 = scmp.eq.s32.totalorder %s22, 0
      %p85 = por %p83, %p84
      %p86 = scmp.ne.s32.totalorder %s72, %s73
      %p87 = scmp.eq.s32.totalorder %s23, 1
      %p88 = por %p86, %p87
      %p90 = scmp.ne.s32.totalorder %s73, %s89
      %p91 = scmp.eq.s32.totalorder %s23, 0
      %p92 = por %p90, %p91
      %s93 = ssub.s32 %s24, %s36
      %p94 = scmp.eq.s32.totalorder %s93, 0
      %s96 = sadd.s32 %s95, 1
      %s97 = scalar_select %p94, %s95, %s96
      %p100 = pneg %p94
      %p101 = scmp.eq.s32.totalorder %s17, 1
      %p102 = por %p100, %p101
      %p103 = scmp.ne.s32.totalorder %s95, %s98
      %p104 = scmp.eq.s32.totalorder %s17, 0
      %p105 = por %p103, %p104
      %p106 = scmp.ne.s32.totalorder %s95, %s98
      %p107 = scmp.eq.s32.totalorder %s22, 1
      %p108 = por %p106, %p107
      %p109 = scmp.ne.s32.totalorder %s98, %s99
      %p110 = scmp.eq.s32.totalorder %s22, 0
      %p111 = por %p109, %p110
      %p112 = scmp.ne.s32.totalorder %s98, %s99
      %p113 = scmp.eq.s32.totalorder %s23, 1
      %p114 = por %p112, %p113
      %p116 = scmp.ne.s32.totalorder %s99, %s115
      %p117 = scmp.eq.s32.totalorder %s23, 0
      %p118 = por %p116, %p117
      %p119 = scmp.le.s32.totalorder 1, %s17
      %p120 = scmp.lt.s32.totalorder %s17, 3
      %p121 = pnand %p119, %p120
      %p122 = pneg %p121
      // Predicated region
      $region9: #{tpu_custom_call.1} parent=5 // pred_check
        _
      $region10: #{tpu_custom_call.1} parent=5 // pred_check_branch
        %124 = sbr.rel (%p121) target = $region12
      $region11: #{tpu_custom_call.1} parent=5 // pred_region
        %s125 = ssub.s32 %s17, 1
      $region12: #{tpu_custom_call.1} parent=5 // pred_fallthru
        _
      %p126 = scmp.lt.s32.totalorder %s17, 2
      // Predicated region
      $region13: #{tpu_custom_call.1} parent=5 // pred_check
        %p127 = pneg %p126
      $region14: #{tpu_custom_call.1} parent=5 // pred_check_branch
        %129 = sbr.rel (%p127) target = $region16
      $region15: #{tpu_custom_call.1} parent=5 // pred_region
        // Predicated region
        $region17: #{tpu_custom_call.1} parent=15 // pred_check
          %p130 = pneg %p51
        $region18: #{tpu_custom_call.1} parent=15 // pred_check_branch
          %132 = sbr.rel (%p130) target = $region20
        $region19: #{tpu_custom_call.1} parent=15 // pred_region
          %s133 = sand.u32 %s41, 1
          %s134 = scalar_lea.sflag [#allocation9], %s133
          %s135 = sand.u32 %s41, 1
          %s136 = smul.addr %s135, 8
          %s137 = scalar_lea.vmem [#allocation8], %s136
          %s138 = smul.u32 2, %s25
          %s140 = ssub.s32 128, 128
          %141 = vsyncadd %s134, %s140
          %s142 = smul.addr %s24, 2
          %s143 = sadd.s32 %s138, %s142
          %s144 = smul.addr %s143, 64
          %s145 = scalar_lea.hbm %s0, %s144
          %s147 = sshll.u32 %s137, 4
          %s148 = int_to_ptr.vmem [resolvable:$true] %s147
          %150 = dma.hbm_to_vmem [thread:$0]  %s145, 128, %s148, %s134
        $region20: #{tpu_custom_call.1} parent=15 // pred_fallthru
          _
        // Predicated region
        $region21: #{tpu_custom_call.1} parent=15 // pred_check
          %p151 = pneg %p79
        $region22: #{tpu_custom_call.1} parent=15 // pred_check_branch
          %153 = sbr.rel (%p151) target = $region24
        $region23: #{tpu_custom_call.1} parent=15 // pred_region
          %s154 = sand.u32 %s69, 1
          %s155 = scalar_lea.sflag [#allocation12], %s154
          %s156 = sand.u32 %s69, 1
          %s157 = smul.addr %s156, 2
          %s158 = scalar_lea.vmem [#allocation11], %s157
          %s159 = smul.u32 2, %s25
          %s161 = ssub.s32 32, 32
          %162 = vsyncadd %s155, %s161
          %s163 = smul.addr %s24, 2
          %s164 = sadd.s32 %s159, %s163
          %s165 = smul.addr %s164, 16
          %s166 = scalar_lea.hbm %s1, %s165
          %s168 = sshll.u32 %s158, 4
          %s169 = int_to_ptr.vmem [resolvable:$true] %s168
          %171 = dma.hbm_to_vmem [thread:$0]  %s166, 32, %s169, %s155
        $region24: #{tpu_custom_call.1} parent=15 // pred_fallthru
          _
      $region16: #{tpu_custom_call.1} parent=5 // pred_fallthru
        _
      %p172 = scmp.le.s32.totalorder 1, %s17
      %p173 = scmp.lt.s32.totalorder %s17, 3
      %p174 = pnand %p172, %p173
      %p175 = pneg %p174
      // Predicated region
      $region25: #{tpu_custom_call.1} parent=5 // pred_check
        _
      $region26: #{tpu_custom_call.1} parent=5 // pred_check_branch
        %177 = sbr.rel (%p174) target = $region28
      $region27: #{tpu_custom_call.1} parent=5 // pred_region
        %s178 = ssub.s32 %s17, 1
        %s179 = sand.u32 %s44, 1
        %s180 = scalar_lea.sflag [#allocation9], %s179
        %s181 = sand.u32 %s44, 1
        %s182 = smul.addr %s181, 8
        %s183 = scalar_lea.vmem [#allocation8], %s182
        // Predicated region
        $region29: #{tpu_custom_call.1} parent=27 // pred_check
          %p184 = pneg %p57
        $region30: #{tpu_custom_call.1} parent=27 // pred_check_branch
          %186 = sbr.rel (%p184) target = $region32
        $region31: #{tpu_custom_call.1} parent=27 // pred_region
          %187 = dma.done %s180, 128
        $region32: #{tpu_custom_call.1} parent=27 // pred_fallthru
          _
        %s188 = sand.u32 %s72, 1
        %s189 = scalar_lea.sflag [#allocation12], %s188
        %s190 = sand.u32 %s72, 1
        %s191 = smul.addr %s190, 2
        %s192 = scalar_lea.vmem [#allocation11], %s191
        // Predicated region
        $region33: #{tpu_custom_call.1} parent=27 // pred_check
          %p193 = pneg %p85
        $region34: #{tpu_custom_call.1} parent=27 // pred_check_branch
          %195 = sbr.rel (%p193) target = $region36
        $region35: #{tpu_custom_call.1} parent=27 // pred_region
          %196 = dma.done %s189, 32
        $region36: #{tpu_custom_call.1} parent=27 // pred_fallthru
          _
        %s197 = sand.u32 %s44, 1
        %s198 = scalar_lea.sflag [#allocation9], %s197
        %s199 = sand.u32 %s44, 1
        %s200 = smul.addr %s199, 8
        %s201 = scalar_lea.vmem [#allocation8], %s200
        %p202 = pneg %p57
        %p203 = pneg %p54
        %s204 = sand.u32 %s72, 1
        %s205 = scalar_lea.sflag [#allocation12], %s204
        %s206 = sand.u32 %s72, 1
        %s207 = smul.addr %s206, 2
        %s208 = scalar_lea.vmem [#allocation11], %s207
        %p209 = pneg %p85
        %p210 = pneg %p82
        %p211 = pneg %p111
        %p212 = pneg %p108
        %s213 = sand.u32 %s98, 1
        %s214 = scalar_lea.sflag [#allocation10], %s213
        %s215 = sand.u32 %s98, 1
        %s216 = scalar_lea.vmem [#allocation13], %s215
        %s217 = smul.u32 2, %s27
        %s218 = smul.u32 2, %s27
        %p219 = scmp.eq.s32.totalorder %s27, 0
        // Predicated region
        $region37: #{tpu_custom_call.1} parent=27 // pred_check
          %p220 = pneg %p219
        $region38: #{tpu_custom_call.1} parent=27 // pred_check_branch
          %222 = sbr.rel (%p220) target = $region40
        $region39: #{tpu_custom_call.1} parent=27 // pred_region
          %vm223 = vcmask 0
          %224 = vst.msk [vmem:[#allocation2] sm:$0x1] %vm223, -1e+30
          %225 = vst.msk [vmem:[#allocation3] sm:$0x1] %vm223, 0.0
          %226 = vst.msk [vmem:[#allocation4] sm:$0x1] %vm223, 0.0
          %227 = vst.msk [vmem:[#allocation5] sm:$0x1] %vm223, 0.0
          %228 = vst.msk [vmem:[#allocation6] sm:$0x1] %vm223, 1.0737418e+09
          %229 = vst.msk [vmem:[#allocation7] sm:$0x1] %vm223, -1.0
        $region40: #{tpu_custom_call.1} parent=27 // pred_fallthru
          _
        %v230 = vld [vmem:[%s183] sm:$0xff]
        %v231 = vld [vmem:[%s192] sm:$0x3]
        %v233 = vcombine.high %v230, %v230
        %vm235 = vcmask 1043456
        %v236 = vsel %vm235, %v230, -inf
        %v237 = vrot.slane %v236, 4
        %v238 = vmax.f32 %v236, %v237
        %v239 = vrot.slane %v238, 2
        %v240 = vmax.f32 %v238, %v239
        %v241 = vrot.slane %v240, 1
        %v242 = vmax.f32 %v240, %v241
        %v243 = vsel %vm235, %v233, -inf
        %v244 = vrot.slane %v243, 4
        %v245 = vmax.f32 %v243, %v244
        %v246 = vrot.slane %v245, 2
        %v247 = vmax.f32 %v245, %v246
        %v248 = vrot.slane %v247, 1
        %v249 = vmax.f32 %v247, %v248
        %v252 = vcombine.low %v242, %v249
        %v254 = vsub.f32 %v230, %v252
        %v255 = vmul.f32 %v254, 1.442695
        %v256 = vpow.pop %v255
        %v258 = vcombine.high %v256, %v256
        %v260 = vsel %vm235, %v256, 0.0
        %v261 = vrot.slane %v260, 4
        %v262 = vadd.f32 %v260, %v261
        %v263 = vrot.slane %v262, 2
        %v264 = vadd.f32 %v262, %v263
        %v265 = vrot.slane %v264, 1
        %v266 = vadd.f32 %v264, %v265
        %v267 = vsel %vm235, %v258, 0.0
        %v268 = vrot.slane %v267, 4
        %v269 = vadd.f32 %v267, %v268
        %v270 = vrot.slane %v269, 2
        %v271 = vadd.f32 %v269, %v270
        %v272 = vrot.slane %v271, 1
        %v273 = vadd.f32 %v271, %v272
        %v274 = vlog2.pop %v266
        %v275 = vmul.f32 %v274, 0.6931472
        %v276 = vlog2.pop %v273
        %v277 = vmul.f32 %v276, 0.6931472
        %v278 = vadd.f32 %v242, %v275
        %v279 = vadd.f32 %v249, %v277
        %v280 = vlaneseq
        %v281 = vshrl.u32 %v280, 7
        %v282 = vlaneseq
        %v283 = vshrl.u32 %v282, 7
        %v284 = vsub.s32 0, %v283
        %v285 = vrot.slane %v231, %v284
        %v286 = vlaneseq
        %v287 = vshrl.u32 %v286, 7
        %v288 = vsub.s32 1, %v287
        %v289 = vrot.slane %v231, %v288
        %vm290 = vcmp.eq.s32.totalorder %v281, %v285
        %vm291 = vcmp.eq.s32.totalorder %v281, %v289
        %v292 = vsel %vm290, %v230, 0.0
        %v293 = vsel %vm291, %v233, 0.0
        %v294 = vsel %vm235, %v292, 0.0
        %v295 = vrot.slane %v294, 4
        %v296 = vadd.f32 %v294, %v295
        %v297 = vrot.slane %v296, 2
        %v298 = vadd.f32 %v296, %v297
        %v299 = vrot.slane %v298, 1
        %v300 = vadd.f32 %v298, %v299
        %v301 = vsel %vm235, %v293, 0.0
        %v302 = vrot.slane %v301, 4
        %v303 = vadd.f32 %v301, %v302
        %v304 = vrot.slane %v303, 2
        %v305 = vadd.f32 %v303, %v304
        %v306 = vrot.slane %v305, 1
        %v307 = vadd.f32 %v305, %v306
        %vm308 = vcmp.ne.s32.totalorder %v231, 255
        %v309 = vsub.f32 %v278, %v300
        %v310 = vsub.f32 %v279, %v307
        %v313 = vcombine.low %v309, %v310
        %v315 = vunpack.c.l.s4 1966171168
        %v316 = vunpack.c.0.s8 %v315
        %v317 = vlaneseq
        %v318 = vshrl.u32 %v317, 7
        %v319 = vsub.s32 %v316, %v318
        %v320 = vrot.slane %v313, %v319
        %v322 = vunpack.c.l.s4 1966171168
        %v323 = vunpack.c.0.s8 %v322
        %v324 = vlaneseq
        %v325 = vshrl.u32 %v324, 7
        %v326 = vsub.s32 %v323, %v325
        %v327 = vrot.slane %v320, %v326
        %v329 = vsel %vm308, %v327, 0.0
        %v330 = vsub.f32 0.0, %v329
        %v331 = vld [vmem:[#allocation2] sm:$0x1]
        %v333 = vlaneseq
        %v334 = vshrl.u32 %v333, 7
        %v335 = vsub.s32 0, %v334
        %v336 = vrot.slane %v330, %v335
        %v337 = vlaneseq
        %v338 = vshrl.u32 %v337, 7
        %v339 = vsub.s32 1, %v338
        %v340 = vrot.slane %v330, %v339
        %vm343 = vcmask 1040384
        %v344 = vsel %vm343, %v336, -inf
        %v345 = vsel %vm343, %v340, -inf
        %v346 = vmax.f32 %v344, %v345
        %347 = vmax.xlane.f32.xlu0 %v346
        %v348 = vpop.xlane.xlu0 %347
        %v349 = vmax.f32 %v331, %v348
        %v350 = vsub.f32 %v331, %v349
        %v351 = vmul.f32 %v350, 1.442695
        %v352 = vpow.pop %v351
        %354 = vset.pattern.permute.xlu0 0
        %355 = vperm.xlu0 %354, %v349
        %v356 = vpop.permute.xlu0 %355
        %v358 = vlaneseq
        %v359 = vshrl.u32 %v358, 7
        %v360 = vsub.s32 0, %v359
        %v361 = vrot.slane %v356, %v360
        %v362 = vsub.f32 %v330, %v361
        %v363 = vmul.f32 %v362, 1.442695
        %v364 = vpow.pop %v363
        %v365 = vld [vmem:[#allocation3] sm:$0x1]
        %v366 = vmul.f32 %v365, %v352
        %v368 = vlaneseq
        %v369 = vshrl.u32 %v368, 7
        %v370 = vsub.s32 0, %v369
        %v371 = vrot.slane %v364, %v370
        %v372 = vlaneseq
        %v373 = vshrl.u32 %v372, 7
        %v374 = vsub.s32 1, %v373
        %v375 = vrot.slane %v364, %v374
        %v378 = vsel %vm343, %v371, 0.0
        %v379 = vsel %vm343, %v375, 0.0
        %v380 = vadd.f32 %v378, %v379
        %381 = vadd.xlane.f32.xlu0 %v380
        %v382 = vpop.xlane.xlu0 %381
        %v383 = vadd.f32 %v366, %v382
        %vm384 = vcmask 0
        %385 = vst.msk [vmem:[#allocation3] sm:$0x1] %vm384, %v383
        %v386 = vld [vmem:[#allocation4] sm:$0x1]
        %v387 = vmul.f32 %v386, %v352
        %v388 = vmul.f32 %v329, %v364
        %v390 = vlaneseq
        %v391 = vshrl.u32 %v390, 7
        %v392 = vsub.s32 0, %v391
        %v393 = vrot.slane %v388, %v392
        %v394 = vlaneseq
        %v395 = vshrl.u32 %v394, 7
        %v396 = vsub.s32 1, %v395
        %v397 = vrot.slane %v388, %v396
        %v400 = vsel %vm343, %v393, 0.0
        %v401 = vsel %vm343, %v397, 0.0
        %v402 = vadd.f32 %v400, %v401
        %403 = vadd.xlane.f32.xlu0 %v402
        %v404 = vpop.xlane.xlu0 %403
        %v405 = vadd.f32 %v387, %v404
        %406 = vst.msk [vmem:[#allocation4] sm:$0x1] %vm384, %v405
        %v407 = vld [vmem:[#allocation5] sm:$0x1]
        %v409 = vlaneseq
        %v410 = vshrl.u32 %v409, 7
        %v411 = vsub.s32 0, %v410
        %v412 = vrot.slane %v329, %v411
        %v413 = vlaneseq
        %v414 = vshrl.u32 %v413, 7
        %v415 = vsub.s32 1, %v414
        %v416 = vrot.slane %v329, %v415
        %v419 = vsel %vm343, %v412, 0.0
        %v420 = vsel %vm343, %v416, 0.0
        %v421 = vadd.f32 %v419, %v420
        %422 = vadd.xlane.f32.xlu0 %v421
        %v423 = vpop.xlane.xlu0 %422
        %v424 = vadd.f32 %v407, %v423
        %425 = vst.msk [vmem:[#allocation5] sm:$0x1] %vm384, %v424
        %426 = vst.msk [vmem:[#allocation2] sm:$0x1] %vm384, %v349
        %v427 = vcvt.s32.f32 %v231
        %v428 = vld [vmem:[#allocation6] sm:$0x1]
        %v429 = vsel %vm308, %v427, 1.0737418e+09
        %v431 = vlaneseq
        %v432 = vshrl.u32 %v431, 7
        %v433 = vsub.s32 0, %v432
        %v434 = vrot.slane %v429, %v433
        %v435 = vlaneseq
        %v436 = vshrl.u32 %v435, 7
        %v437 = vsub.s32 1, %v436
        %v438 = vrot.slane %v429, %v437
        %v441 = vsel %vm343, %v434, inf
        %v442 = vsel %vm343, %v438, inf
        %v443 = vmin.f32 %v441, %v442
        %444 = vmin.xlane.f32.xlu0 %v443
        %v445 = vpop.xlane.xlu0 %444
        %v446 = vmin.f32 %v428, %v445
        %447 = vst.msk [vmem:[#allocation6] sm:$0x1] %vm384, %v446
        %v448 = vld [vmem:[#allocation7] sm:$0x1]
        %v449 = vsel %vm308, %v427, -1.0
        %v451 = vlaneseq
        %v452 = vshrl.u32 %v451, 7
        %v453 = vsub.s32 0, %v452
        %v454 = vrot.slane %v449, %v453
        %v455 = vlaneseq
        %v456 = vshrl.u32 %v455, 7
        %v457 = vsub.s32 1, %v456
        %v458 = vrot.slane %v449, %v457
        %v461 = vsel %vm343, %v454, -inf
        %v462 = vsel %vm343, %v458, -inf
        %v463 = vmax.f32 %v461, %v462
        %464 = vmax.xlane.f32.xlu0 %v463
        %v465 = vpop.xlane.xlu0 %464
        %v466 = vmax.f32 %v448, %v465
        %467 = vst.msk [vmem:[#allocation7] sm:$0x1] %vm384, %v466
        // Predicated region
        $region41: #{tpu_custom_call.1} parent=27 // pred_check
          %p468 = pneg %p219
        $region42: #{tpu_custom_call.1} parent=27 // pred_check_branch
          %470 = sbr.rel (%p468) target = $region44
        $region43: #{tpu_custom_call.1} parent=27 // pred_region
          %v471 = vld [vmem:[#allocation6] sm:$0x1]
          %v472 = vld [vmem:[#allocation7] sm:$0x1]
          %vm473 = vcmp.ge.f32.partialorder %v471, %v472
          %v474 = vld [vmem:[#allocation4] sm:$0x1]
          %v475 = vmul.f32 %v474, 256.0
          %v476 = vld [vmem:[#allocation3] sm:$0x1]
          %v477 = vrcp.pop %v476
          %v478 = vmul.f32 %v475, %v477
          %v479 = vld [vmem:[#allocation5] sm:$0x1]
          %v480 = vsel %vm473, %v479, %v478
          %482 = vset.pattern.permute.xlu0 0
          %483 = vperm.xlu0 %482, %v480
          %v484 = vpop.permute.xlu0 %483
          %v486 = vlaneseq
          %v487 = vshrl.u32 %v486, 7
          %v488 = vsub.s32 0, %v487
          %v489 = vrot.slane %v484, %v488
          %490 = vst [vmem:[%s216] sm:$0x1] %v489
        $region44: #{tpu_custom_call.1} parent=27 // pred_fallthru
          _
        %s491 = sand.u32 %s98, 1
        %s492 = scalar_lea.sflag [#allocation10], %s491
        %s493 = sand.u32 %s98, 1
        %s494 = scalar_lea.vmem [#allocation13], %s493
        // Predicated region
        $region45: #{tpu_custom_call.1} parent=27 // pred_check
          %p495 = pneg %p108
        $region46: #{tpu_custom_call.1} parent=27 // pred_check_branch
          %497 = sbr.rel (%p495) target = $region48
        $region47: #{tpu_custom_call.1} parent=27 // pred_region
          %s499 = ssub.s32 16, 16
          %500 = vsyncadd %s492, %s499
          %s501 = smul.addr %s26, 16
          %s502 = scalar_lea.hbm %s2, %s501
          %s504 = sshll.u32 %s494, 4
          %s505 = int_to_ptr.vmem [resolvable:$true] %s504
          %507 = dma.vmem_to_hbm [thread:$0]  %s505, 16, %s502, %s492
        $region48: #{tpu_custom_call.1} parent=27 // pred_fallthru
          _
      $region28: #{tpu_custom_call.1} parent=5 // pred_fallthru
        _
      %p508 = scmp.le.s32.totalorder 2, %s17
      // Predicated region
      $region49: #{tpu_custom_call.1} parent=5 // pred_check
        %p509 = pneg %p508
      $region50: #{tpu_custom_call.1} parent=5 // pred_check_branch
        %511 = sbr.rel (%p509) target = $region52
      $region51: #{tpu_custom_call.1} parent=5 // pred_region
        %s512 = ssub.s32 %s17, 2
        // Predicated region
        $region53: #{tpu_custom_call.1} parent=51 // pred_check
          %p513 = pneg %p114
        $region54: #{tpu_custom_call.1} parent=51 // pred_check_branch
          %515 = sbr.rel (%p513) target = $region56
        $region55: #{tpu_custom_call.1} parent=51 // pred_region
          %s516 = sand.u32 %s99, 1
          %s517 = scalar_lea.sflag [#allocation10], %s516
          %s518 = sand.u32 %s99, 1
          %s519 = scalar_lea.vmem [#allocation13], %s518
          %520 = dma.done %s517, 16
        $region56: #{tpu_custom_call.1} parent=51 // pred_fallthru
          _
      $region52: #{tpu_custom_call.1} parent=5 // pred_fallthru
        _
    $region6: #{tpu_custom_call.1} parent=1 // loop_footer
      %s21 = sadd.s32 1, %s17
    $region7: #{tpu_custom_call.1} parent=1 // loop_footer_branch
      %16 = sbr.rel target = $region3
    $region8: #{tpu_custom_call.1} parent=1 // loop_exit
      _
    %521 = vsyncpa [#allocation9], 1
    %s522 = scalar_lea.sflag [#allocation9], 1
    %523 = vsyncpa %s522, 1
    %524 = vsyncpa [#allocation12], 1
    %s525 = scalar_lea.sflag [#allocation12], 1
    %526 = vsyncpa %s525, 1
    %527 = vsyncpa [#allocation10], 1
    %s528 = scalar_lea.sflag [#allocation10], 1
    %529 = vsyncpa %s528, 1

</llo_original>
